<compile_context>
chip_gen: v6e
topology: v6e:2x2x1
jax: 0.10.0
libtpu: 0.0.40
codegen_flags: <defaults>
</compile_context>

<pallas_src>
import jax
import jax.numpy as jnp
from jax.experimental import pallas as pl
from jax.experimental.pallas import tpu as pltpu

_MIB = 1 << 20


def _round_up(x, m):
    return ((x + m - 1) // m) * m


def _round_down(x, m):
    return max(m, (x // m) * m)


def _hw_budgets():
    """Return (per-output-block byte budget, scoped vmem_limit_bytes)."""
    try:
        vmem_cap = int(pltpu.get_tpu_info().vmem_capacity_bytes)
    except Exception:
        vmem_cap = None
    if vmem_cap is not None and vmem_cap >= 100 * _MIB:
        # v5e / v6e: 128 MiB physical VMEM -> bigger blocks, fewer grid steps.
        return 16 * _MIB, 64 * _MIB
    # v7x (64 MiB physical / 32 MiB scoped) or unknown: conservative defaults.
    return 8 * _MIB, 32 * _MIB


def _expand_as_kernel(x_ref, o_ref):
    # x_ref: (tile_n, 1) single-channel features (resident across C tiles)
    # o_ref: (tile_n, tile_c) expanded output block (lane-dense store)
    # Lowers to a lane-broadcast of the input column + plain unmasked vst's
    # (no mul-by-ones / select chain), so the kernel stays HBM-write bound.
    o_ref[...] = jnp.broadcast_to(x_ref[...], o_ref.shape)


def expand_as(feats, shape, *, tile_n=None, tile_c=None, min_pallas_bytes=_MIB):
    """Pallas equivalent of ExpandAs.forward on the dense feature matrix.

    feats: [N, 1] array (x.F)
    shape: target shape (N, C) with shape[0] == N
    Returns the expanded [N, C] feature matrix.
    """
    N, C_in = feats.shape
    assert C_in == 1, "ExpandAs expects single-channel features (x.F.shape[1] == 1)"
    shape = tuple(int(s) for s in shape)
    assert len(shape) == 2, "ExpandAs target shape must be 2-D (N, C)"
    assert shape[0] == N, "expand target must keep the number of points"
    C = shape[1]

    itemsize = jnp.dtype(feats.dtype).itemsize
    total_bytes = N * C * itemsize

    # Fallbacks:
    #  * C < 128: lane-sparse outputs lower to masked partial stores.
    #  * tiny total output: pallas_call launch/pipeline overhead dominates and
    #    XLA can usually fuse a bare broadcast_to into the consumer.
    if C < 128 or total_bytes < min_pallas_bytes:
        return jnp.broadcast_to(feats, (N, C))

    block_budget, vmem_limit = _hw_budgets()
    # Packed sublane multiple: f32 -> 8, bf16 -> 16, int8/fp8 -> 32.
    sub = max(8, 32 // itemsize)

    # --- Channel tile: prefer the full channel width (contiguous HBM blocks).
    if tile_c is None:
        if sub * (C + 128) * itemsize <= block_budget:
            tile_c = C
        else:
            tile_c = 1024  # C is huge; fall back to lane-dense 1024-wide tiles
    else:
        tile_c = _round_up(int(tile_c), 128)
        if tile_c > C:
            tile_c = C
    padded_tc = _round_up(tile_c, 128)

    # --- Row tile. Per-row VMEM cost: one output row (padded_tc lanes) plus
    # the lane-padded (tile_n, 1) input row (a full 128-lane VMEM row); both
    # are double buffered by the pipeline.
    per_row = (padded_tc + 128) * itemsize
    usable = vmem_limit - 2 * _MIB          # headroom for Mosaic internals
    cap = min(block_budget, usable // 2)    # one buffer of (output + input)
    max_tile_n = _round_down(cap // per_row, sub)
    if tile_n is None:
        tile_n = max_tile_n
    else:
        tile_n = _round_up(int(tile_n), sub)
        tile_n = min(tile_n, max_tile_n)
    tile_n = max(sub, tile_n)
    if tile_n >= N:
        tile_n = N  # single block spanning all rows (full extent is legal)

    # Keep >= 2 grid blocks for non-trivial outputs so megacore chips (v7x has
    # 2 TensorCores) can shard the grid and share the HBM write bandwidth.
    if tile_n >= N and tile_c >= C and total_bytes > 4 * _MIB:
        half = _round_up((N + 1) // 2, sub)
        if half < N:
            tile_n = half

    grid = (pl.cdiv(N, tile_n), pl.cdiv(C, tile_c))

    return pl.pallas_call(
        _expand_as_kernel,
        out_shape=jax.ShapeDtypeStruct((N, C), feats.dtype),
        grid_spec=pltpu.PrefetchScalarGridSpec(
            num_scalar_prefetch=0,
            grid=grid,
            # Input ignores the channel grid axis -> same block index across
            # consecutive j, so the [tile_n, 1] column is DMA'd once per row
            # tile instead of once per (i, j) step.
            in_specs=[pl.BlockSpec((tile_n, 1), lambda i, j: (i, 0))],
            out_specs=pl.BlockSpec((tile_n, tile_c), lambda i, j: (i, j)),
        ),
        compiler_params=pltpu.CompilerParams(
            dimension_semantics=("parallel", "parallel"),
            vmem_limit_bytes=vmem_limit,
        ),
    )(feats)


def expand_as_sparse(coords, feats, shape):
    """Mimics constructing a new ME.SparseTensor: coords are reused untouched,
    only the feature matrix is expanded (inside the Pallas kernel)."""
    # TODO(synk): ME.SparseTensor / coords_key / coords_manager bookkeeping has
    # no Pallas or JAX equivalent; coordinates are simply passed through.
    new_feats = expand_as(feats, shape)
    return coords, new_feats


if __name__ == "__main__":
    key = jax.random.PRNGKey(0)
    k_coords, k_feats = jax.random.split(key)

    # --- Small-shape test matching the module's typical use; force the Pallas
    # path (min_pallas_bytes=0) so the kernel itself is exercised. ---
    N = 64   # number of sparse points
    C = 256  # target feature width to expand to
    coords = jax.random.randint(k_coords, (N, 4), minval=0, maxval=16, dtype=jnp.int32)
    feats = jax.random.normal(k_feats, (N, 1), dtype=jnp.float32)

    out_feats = jax.block_until_ready(expand_as(feats, (N, C), min_pallas_bytes=0))
    ref = jnp.broadcast_to(feats, (N, C))
    assert out_feats.shape == (N, C)
    assert out_feats.dtype == feats.dtype
    assert jnp.array_equal(out_feats, ref)

    # Sparse-tensor wrapper (coords passed through untouched).
    out_coords, out_feats2 = expand_as_sparse(coords, feats, (N, C))
    out_feats2 = jax.block_until_ready(out_feats2)
    assert jnp.array_equal(out_coords, coords)
    assert jnp.array_equal(out_feats2, ref)

    # --- Ragged rows + explicit tiles: N not a multiple of tile_n, multiple
    # grid steps on both axes (exercises partial row block masking). ---
    N2, C2 = 50, 384
    feats2 = jax.random.normal(jax.random.PRNGKey(1), (N2, 1), dtype=jnp.float32)
    out2 = jax.block_until_ready(
        expand_as(feats2, (N2, C2), tile_n=16, tile_c=128, min_pallas_bytes=0))
    assert jnp.array_equal(out2, jnp.broadcast_to(feats2, (N2, C2)))

    # --- Default-threshold Pallas path (output > 1 MiB, contiguous tile_c=C;
    # > 4 MiB so the megacore grid split kicks in). ---
    N3, C3 = 2048, 768
    feats3 = jax.random.normal(jax.random.PRNGKey(2), (N3, 1), dtype=jnp.float32)
    out3 = jax.block_until_ready(expand_as(feats3, (N3, C3)))
    assert jnp.array_equal(out3, jnp.broadcast_to(feats3, (N3, C3)))

    # --- bf16 path (exercises the 16-row packed sublane multiple). ---
    feats4 = feats3.astype(jnp.bfloat16)
    out4 = jax.block_until_ready(expand_as(feats4, (N3, C3), min_pallas_bytes=0))
    assert out4.dtype == jnp.bfloat16
    assert jnp.array_equal(out4, jnp.broadcast_to(feats4, (N3, C3)))

    # --- Narrow-C / tiny-output fallback paths (plain broadcast). ---
    out5 = jax.block_until_ready(expand_as(feats, (N, 32)))
    assert jnp.array_equal(out5, jnp.broadcast_to(feats, (N, 32)))
    out6 = jax.block_until_ready(expand_as(feats, (N, 256)))  # 64 KiB < 1 MiB
    assert jnp.array_equal(out6, ref)

    print("KERNEL_OK")
</pallas_src>

<mosaic_0001>
module attributes {stable_mosaic.version = 11 : i64} {
  func.func @_expand_as_kernel(%arg0: i32, %arg1: i32, %arg2: memref<64x1xf32, #tpu.memory_space<vmem>>, %arg3: memref<64x256xf32, #tpu.memory_space<vmem>>) attributes {dimension_semantics = [#tpu.dimension_semantics<parallel>, #tpu.dimension_semantics<parallel>], iteration_bounds = array<i64: 1, 1>, scalar_prefetch = 0 : i64, scratch_operands = 0 : i64, tpu.core_type = #tpu.core_type<tc>, window_params = [{transform_indices = @transform_0, window_bounds = array<i64: 64, 1>}, {transform_indices = @transform_1, window_bounds = array<i64: 64, 256>}]} {
    %c0 = arith.constant 0 : index
    %c0_0 = arith.constant 0 : index
    %0 = vector.load %arg2[%c0, %c0_0] : memref<64x1xf32, #tpu.memory_space<vmem>>, vector<64x1xf32>
    %1 = vector.shape_cast %0 : vector<64x1xf32> to vector<64x1xf32>
    %2 = vector.broadcast %1 : vector<64x1xf32> to vector<64x256xf32>
    %c0_1 = arith.constant 0 : index
    %c0_2 = arith.constant 0 : index
    %3 = vector.load %arg3[%c0_1, %c0_2] : memref<64x256xf32, #tpu.memory_space<vmem>>, vector<64x256xf32>
    tpu.vector_store %arg3[%c0_1, %c0_2], %2 {strides = array<i32>} : memref<64x256xf32, #tpu.memory_space<vmem>>, vector<64x256xf32>,
    return
  }
  func.func @transform_0(%arg0: i32, %arg1: i32) -> (i32, i32) {
    %c0_i32 = arith.constant 0 : i32
    %c0_i32_0 = arith.constant 0 : i32
    return %arg0, %c0_i32 : i32, i32
  }
  func.func @transform_1(%arg0: i32, %arg1: i32) -> (i32, i32) {
    %c0_i32 = arith.constant 0 : i32
    return %arg0, %arg1 : i32, i32
  }
}

</mosaic_0001>

<llo_original>
// kernel: tpu_custom_call.1
$region0: #{tpu_custom_call.1}
  #allocation0 [shape = 'u32[]', space=smem, size = 0x4, offset = 0x4, fixed_abs, tag = 'smem constant byte address 0x4 - core index']
  #allocation1 [shape = 'u32[144,128]{1,0:T(1,128)}', space=vmem, size = 0x12000, scoped, tag = 'internal scratch']
  %s0 = inlined_call_operand.vmem [shape: f32[64,1], index: 0, kind: input, shape index: {}]
  %s1 = inlined_call_operand.hbm [shape: f32[64,256], index: 1, kind: output, shape index: {}]
  %s2 = sld [smem:[#allocation0]]
  $region14: #{tpu_custom_call.1} parent=0
    _
  %s4 = ssub.s32 1, %s2
  %s5 = scalar_select 0, %s4, %s2
  $region1: #{tpu_custom_call.1} parent=0
    #allocation2 [shape = 'u8[65536]{0}', space=vmem, size = 0x10000, scoped, tag = 'output window, operand 0, single buffered']
    #allocation3 [shape = 's32[1]{0}', space=sflag, size = 0x4, scoped, tag = 'scoped memory for tpu_custom_call.1']
    %6 = vsyncpa [#allocation3], 0
    // Predicated region
    $region2: #{tpu_custom_call.1} parent=1 // pred_check
      _
    $region3: #{tpu_custom_call.1} parent=1 // pred_check_branch
      %8 = sbr.rel (0) target = $region5
    $region4: #{tpu_custom_call.1} parent=1 // pred_region
      _
    $region5: #{tpu_custom_call.1} parent=1 // pred_fallthru
      _
    %v9 = vld [vmem:[%s0] sm:$0xff]
    %v10 = vld [vmem:[%s0 + $0x8] sm:$0xff]
    %v11 = vld [vmem:[%s0 + $0x10] sm:$0xff]
    %v12 = vld [vmem:[%s0 + $0x18] sm:$0xff]
    %v13 = vld [vmem:[%s0 + $0x20] sm:$0xff]
    %v14 = vld [vmem:[%s0 + $0x28] sm:$0xff]
    %v15 = vld [vmem:[%s0 + $0x30] sm:$0xff]
    %v16 = vld [vmem:[%s0 + $0x38] sm:$0xff]
    %18 = vset.pattern.permute.xlu0 0
    %19 = vperm.xlu0 %18, %v9
    %v20 = vpop.permute.xlu0 %19
    %23 = vset.pattern.permute.xlu0 0
    %24 = vperm.xlu0 %23, %v10
    %v25 = vpop.permute.xlu0 %24
    %28 = vset.pattern.permute.xlu0 0
    %29 = vperm.xlu0 %28, %v11
    %v30 = vpop.permute.xlu0 %29
    %33 = vset.pattern.permute.xlu0 0
    %34 = vperm.xlu0 %33, %v12
    %v35 = vpop.permute.xlu0 %34
    %38 = vset.pattern.permute.xlu0 0
    %39 = vperm.xlu0 %38, %v13
    %v40 = vpop.permute.xlu0 %39
    %43 = vset.pattern.permute.xlu0 0
    %44 = vperm.xlu0 %43, %v14
    %v45 = vpop.permute.xlu0 %44
    %48 = vset.pattern.permute.xlu0 0
    %49 = vperm.xlu0 %48, %v15
    %v50 = vpop.permute.xlu0 %49
    %53 = vset.pattern.permute.xlu0 0
    %54 = vperm.xlu0 %53, %v16
    %v55 = vpop.permute.xlu0 %54
    %57 = vst [vmem:[#allocation2] sm:$0xff] %v20
    %58 = vst [vmem:[#allocation2 + $0x8] sm:$0xff] %v20
    %59 = vst [vmem:[#allocation2 + $0x10] sm:$0xff] %v25
    %60 = vst [vmem:[#allocation2 + $0x18] sm:$0xff] %v25
    %61 = vst [vmem:[#allocation2 + $0x20] sm:$0xff] %v30
    %62 = vst [vmem:[#allocation2 + $0x28] sm:$0xff] %v30
    %63 = vst [vmem:[#allocation2 + $0x30] sm:$0xff] %v35
    %64 = vst [vmem:[#allocation2 + $0x38] sm:$0xff] %v35
    %65 = vst [vmem:[#allocation2 + $0x40] sm:$0xff] %v40
    %66 = vst [vmem:[#allocation2 + $0x48] sm:$0xff] %v40
    %67 = vst [vmem:[#allocation2 + $0x50] sm:$0xff] %v45
    %68 = vst [vmem:[#allocation2 + $0x58] sm:$0xff] %v45
    %69 = vst [vmem:[#allocation2 + $0x60] sm:$0xff] %v50
    %70 = vst [vmem:[#allocation2 + $0x68] sm:$0xff] %v50
    %71 = vst [vmem:[#allocation2 + $0x70] sm:$0xff] %v55
    %72 = vst [vmem:[#allocation2 + $0x78] sm:$0xff] %v55
    // Predicated region
    $region6: #{tpu_custom_call.1} parent=1 // pred_check
      _
    $region7: #{tpu_custom_call.1} parent=1 // pred_check_branch
      %74 = sbr.rel (0) target = $region9
    $region8: #{tpu_custom_call.1} parent=1 // pred_region
      %s76 = ssub.s32 2048, 2048
      %77 = vsyncadd [#allocation3], %s76
      %s78 = sshll.u32 [#allocation2], 4
      %s79 = int_to_ptr.vmem [resolvable:$true] %s78
      %84 = dma.vmem_to_hbm [thread:$0]  %s79, 2048, %s1, [#allocation3], 256, 256, 16
    $region9: #{tpu_custom_call.1} parent=1 // pred_fallthru
      _
    // Predicated region
    $region10: #{tpu_custom_call.1} parent=1 // pred_check
      _
    $region11: #{tpu_custom_call.1} parent=1 // pred_check_branch
      %86 = sbr.rel (0) target = $region13
    $region12: #{tpu_custom_call.1} parent=1 // pred_region
      %87 = dma.done [#allocation3], 2048
    $region13: #{tpu_custom_call.1} parent=1 // pred_fallthru
      _
    %88 = vsyncpa [#allocation3], 1

</llo_original>
